<compile_context>
chip_gen: v7x
topology: tpu7x:2x2x1
jax: 0.10.0
libtpu: 0.0.40
codegen_flags: <defaults>
</compile_context>

<pallas_src>
import jax
import jax.numpy as jnp
from jax.experimental import pallas as pl
from jax.experimental.pallas import tpu as pltpu


# ---------------------------------------------------------------------------
# Kernel
# ---------------------------------------------------------------------------
def _trans_loss_kernel(scal_ref, x_ref, o_ref):
    # scal_ref (SMEM, float32[2]): [scale, thresh]
    #   scale  = -(1 - exp(-(iteration - 200000 + 1) * alpha)) * trans_factor
    #   thresh = min(max_trans, base_trans)  if (iteration - start_iter) <= 2000
    #          = max_trans                   otherwise
    scale = scal_ref[0]
    thresh = scal_ref[1]
    o_ref[...] = scale * jnp.minimum(x_ref[...], thresh)


# ---------------------------------------------------------------------------
# Tiling helpers
# ---------------------------------------------------------------------------
_TILE_BUDGET_BYTES = 2 * 1024 * 1024  # ~2 MiB f32 per tile: saturates HBM BW
                                      # and keeps 4x double-buffered footprint
                                      # (~8 MiB) well inside every generation's
                                      # scoped VMEM limit (incl. v7x).


def _largest_divisor_multiple(dim, base, cap):
    """Largest multiple of `base` that divides `dim` and is <= cap (>= base)."""
    best = base
    d = base
    limit = min(dim, max(cap, base))
    while d <= limit:
        if dim % d == 0:
            best = d
        d += base
    return best


def _pick_block(R, C):
    # Lane-dense column tile first (multiple of 128, divides C, <= 2048 lanes).
    block_cols = _largest_divisor_multiple(C, 128, 2048)
    # Then as many rows as fit the byte budget (multiple of 8, divides R).
    cap_rows = max(8, (_TILE_BUDGET_BYTES // (block_cols * 4)) // 8 * 8)
    block_rows = _largest_divisor_multiple(R, 8, cap_rows)
    return block_rows, block_cols


# ---------------------------------------------------------------------------
# Wrapper (jit-friendly; scalars may be traced device values)
# ---------------------------------------------------------------------------
def trans_loss_pallas(trans_mean, iteration, start_iter, alpha, max_trans,
                      base_trans=0.4, trans_factor=1.0):
    """Pallas implementation of TransLoss.forward.

    trans_mean: float32[R, C] with R % 8 == 0 and C % 128 == 0.
    iteration / start_iter / alpha / max_trans / base_trans / trans_factor:
        python numbers or traced 0-D JAX scalars.
    """
    trans_mean = jnp.asarray(trans_mean, jnp.float32)
    R, C = trans_mean.shape
    assert R % 8 == 0 and C % 128 == 0, "pad trans_mean to (8,128) multiples"

    # --- hoisted scalar math (traced; runs once on the scalar path) ---------
    it = jnp.asarray(iteration, jnp.float32)
    start_it = jnp.asarray(start_iter, jnp.float32)
    alpha_f = jnp.asarray(alpha, jnp.float32)
    max_t = jnp.asarray(max_trans, jnp.float32)
    base_t = jnp.asarray(base_trans, jnp.float32)
    factor = jnp.asarray(trans_factor, jnp.float32)

    # NOTE: 200000 is hard-coded in the original module (independent of
    # start_iter); kept as-is to preserve forward semantics.
    annealing = 1.0 - jnp.exp(-(it - 200000.0 + 1.0) * alpha_f)
    scale = -annealing * factor
    early = (it - start_it) <= 2000.0
    thresh = jnp.where(early, jnp.minimum(max_t, base_t), max_t)
    scalars = jnp.stack([scale, thresh]).astype(jnp.float32)  # f32[2]

    # --- tiling -------------------------------------------------------------
    block_rows, block_cols = _pick_block(R, C)
    grid = (R // block_rows, C // block_cols)

    return pl.pallas_call(
        _trans_loss_kernel,
        out_shape=jax.ShapeDtypeStruct((R, C), jnp.float32),
        grid_spec=pl.GridSpec(
            grid=grid,
            in_specs=[
                pl.BlockSpec((2,), lambda i, j: (0,),
                             memory_space=pltpu.SMEM),
                pl.BlockSpec((block_rows, block_cols), lambda i, j: (i, j)),
            ],
            out_specs=pl.BlockSpec((block_rows, block_cols),
                                   lambda i, j: (i, j)),
        ),
        compiler_params=pltpu.CompilerParams(
            dimension_semantics=("parallel", "parallel"),
            vmem_limit_bytes=32 * 1024 * 1024,  # 4x 2 MiB tiles fit with room
        ),
    )(scalars, trans_mean)


# TODO(synk): if the loss is ultimately reduced to a scalar (mean/sum) the
# output writeback could be fused into the kernel (accumulate in VMEM scratch,
# grid axis "arbitrary"), halving HBM traffic; the full-tensor output is kept
# here to match the module's forward signature.


# ---------------------------------------------------------------------------
# Pure-JAX reference (mirrors the PyTorch module exactly)
# ---------------------------------------------------------------------------
def _trans_loss_ref(trans_mean, iteration, *, start_iter, alpha, max_trans,
                    base_trans=0.4, trans_factor=1.0):
    annealing = 1.0 - jnp.exp(jnp.asarray(-(iteration - 200000 + 1) * alpha,
                                          jnp.float32))
    if iteration - start_iter <= 2000:
        clipped = jnp.minimum(jnp.minimum(trans_mean, base_trans), max_trans)
    else:
        clipped = jnp.minimum(trans_mean, max_trans)
    return -annealing * trans_factor * clipped


if __name__ == "__main__":
    key = jax.random.PRNGKey(0)

    # "Parameters" of TransLoss.__init__, initialized deterministically.
    start_iter = 200000
    alpha = 1e-4
    max_trans = 0.88
    focal = 500.0                      # only used by update_trans_factor
    radius = 2.0
    trans_factor = float(jnp.minimum(1.0, focal ** 2 / (radius / 4.0) ** 2 / 1.2))
    trans_factor = min(trans_factor, 1.0)

    # Small example input: per-ray mean transmittance values in [0, 1].
    trans_mean = jax.random.uniform(key, (16, 256), dtype=jnp.float32)

    # Jit the wrapper once; iteration is passed as a traced device scalar, so
    # both the early and late phases reuse the same compiled executable.
    trans_loss_jit = jax.jit(trans_loss_pallas)

    # Case 1: early phase (iteration - start_iter <= 2000) -> base_trans clamp.
    it_early = jnp.asarray(200500, jnp.int32)
    out_early = trans_loss_jit(trans_mean, it_early, start_iter, alpha,
                               max_trans, 0.4, trans_factor)
    jax.block_until_ready(out_early)
    ref_early = _trans_loss_ref(trans_mean, 200500, start_iter=start_iter,
                                alpha=alpha, max_trans=max_trans,
                                trans_factor=trans_factor)

    # Case 2: late phase -> only max_trans clamp.
    it_late = jnp.asarray(250000, jnp.int32)
    out_late = trans_loss_jit(trans_mean, it_late, start_iter, alpha,
                              max_trans, 0.4, trans_factor)
    jax.block_until_ready(out_late)
    ref_late = _trans_loss_ref(trans_mean, 250000, start_iter=start_iter,
                               alpha=alpha, max_trans=max_trans,
                               trans_factor=trans_factor)

    assert jnp.allclose(out_early, ref_early, atol=1e-5, rtol=1e-5)
    assert jnp.allclose(out_late, ref_late, atol=1e-5, rtol=1e-5)

    # A second, larger shape to exercise the multi-tile grid path.
    trans_mean_big = jax.random.uniform(jax.random.PRNGKey(1), (1024, 512),
                                        dtype=jnp.float32)
    out_big = trans_loss_jit(trans_mean_big, it_late, start_iter, alpha,
                             max_trans, 0.4, trans_factor)
    jax.block_until_ready(out_big)
    ref_big = _trans_loss_ref(trans_mean_big, 250000, start_iter=start_iter,
                              alpha=alpha, max_trans=max_trans,
                              trans_factor=trans_factor)
    assert jnp.allclose(out_big, ref_big, atol=1e-5, rtol=1e-5)

    print("KERNEL_OK")
</pallas_src>

<mosaic_0001>
module attributes {stable_mosaic.version = 11 : i64} {
  func.func @_trans_loss_kernel(%arg0: i32, %arg1: i32, %arg2: memref<2xf32, #tpu.memory_space<smem>>, %arg3: memref<16x256xf32, #tpu.memory_space<vmem>>, %arg4: memref<16x256xf32, #tpu.memory_space<vmem>>) attributes {dimension_semantics = [#tpu.dimension_semantics<parallel>, #tpu.dimension_semantics<parallel>], iteration_bounds = array<i64: 1, 1>, scalar_prefetch = 0 : i64, scratch_operands = 0 : i64, tpu.core_type = #tpu.core_type<tc>, window_params = [{transform_indices = @transform_0, window_bounds = array<i64: 2>}, {transform_indices = @transform_1, window_bounds = array<i64: 16, 256>}, {transform_indices = @transform_2, window_bounds = array<i64: 16, 256>}]} {
    %c0 = arith.constant 0 : index
    %0 = memref.load %arg2[%c0] : memref<2xf32, #tpu.memory_space<smem>>
    %c1 = arith.constant 1 : index
    %1 = memref.load %arg2[%c1] : memref<2xf32, #tpu.memory_space<smem>>
    %c0_0 = arith.constant 0 : index
    %c0_1 = arith.constant 0 : index
    %2 = vector.load %arg3[%c0_0, %c0_1] : memref<16x256xf32, #tpu.memory_space<vmem>>, vector<16x256xf32>
    %3 = vector.broadcast %1 : f32 to vector<16x256xf32>
    %4 = arith.minimumf %2, %3 : vector<16x256xf32>
    %5 = vector.broadcast %0 : f32 to vector<16x256xf32>
    %6 = arith.mulf %5, %4 : vector<16x256xf32>
    %c0_2 = arith.constant 0 : index
    %c0_3 = arith.constant 0 : index
    %7 = vector.load %arg4[%c0_2, %c0_3] : memref<16x256xf32, #tpu.memory_space<vmem>>, vector<16x256xf32>
    tpu.vector_store %arg4[%c0_2, %c0_3], %6 {strides = array<i32>} : memref<16x256xf32, #tpu.memory_space<vmem>>, vector<16x256xf32>,
    return
  }
  func.func @transform_0(%arg0: i32, %arg1: i32) -> i32 {
    %c0_i32 = arith.constant 0 : i32
    %c0_i32_0 = arith.constant 0 : i32
    return %c0_i32 : i32
  }
  func.func @transform_1(%arg0: i32, %arg1: i32) -> (i32, i32) {
    %c0_i32 = arith.constant 0 : i32
    return %arg0, %arg1 : i32, i32
  }
  func.func @transform_2(%arg0: i32, %arg1: i32) -> (i32, i32) {
    %c0_i32 = arith.constant 0 : i32
    return %arg0, %arg1 : i32, i32
  }
}

</mosaic_0001>

<llo_original>
// kernel: trans_loss_pallas.1
$region0: #{trans_loss_pallas.1}
  #allocation0 [shape = 'u32[]', space=smem, size = 0x4, offset = 0x4, fixed_abs, tag = 'smem constant byte address 0x4 - core index']
  #allocation1 [shape = 'u32[144,128]{1,0:T(1,128)}', space=vmem, size = 0x12000, scoped, tag = 'internal scratch']
  %s0 = inlined_call_operand.vmem [shape: f32[2], index: 0, kind: input, shape index: {}]
  %s1 = inlined_call_operand.vmem [shape: f32[16,256], index: 1, kind: input, shape index: {}]
  %s2 = inlined_call_operand.hbm [shape: f32[16,256], index: 2, kind: output, shape index: {}]
  %s3 = sld [smem:[#allocation0]]
  $region22: #{trans_loss_pallas.1} parent=0
    _
  %s5 = ssub.s32 1, %s3
  %s6 = scalar_select 0, %s5, %s3
  $region1: #{trans_loss_pallas.1} parent=0
    #allocation2 [shape = 'u8[512]{0}', space=smem, size = 0x200, scoped, tag = 'input window, operand 0, single buffered']
    #allocation3 [shape = 's32[1]{0}', space=sflag, size = 0x4, scoped, tag = 'scoped memory for trans_loss_pallas.1']
    #allocation4 [shape = 's32[1]{0}', space=sflag, size = 0x4, scoped, tag = 'scoped memory for trans_loss_pallas.1']
    #allocation5 [shape = 'u8[16384]{0}', space=vmem, size = 0x4000, scoped, tag = 'output window, operand 0, single buffered']
    %7 = vsyncpa [#allocation4], 0
    %8 = vsyncpa [#allocation3], 0
    // Predicated region
    $region2: #{trans_loss_pallas.1} parent=1 // pred_check
      _
    $region3: #{trans_loss_pallas.1} parent=1 // pred_check_branch
      %10 = sbr.rel (0) target = $region5
    $region4: #{trans_loss_pallas.1} parent=1 // pred_region
      %s12 = ssub.s32 16, 16
      %13 = vsyncadd [#allocation4], %s12
      %s15 = sshll.u32 %s0, 4
      %s16 = int_to_ptr.vmem [resolvable:$true] %s15
      %18 = dma.vmem_to_smem %s16, 16, [#allocation2], [#allocation4]
    $region5: #{trans_loss_pallas.1} parent=1 // pred_fallthru
      _
    // Predicated region
    $region6: #{trans_loss_pallas.1} parent=1 // pred_check
      _
    $region7: #{trans_loss_pallas.1} parent=1 // pred_check_branch
      %20 = sbr.rel (0) target = $region9
    $region8: #{trans_loss_pallas.1} parent=1 // pred_region
      _
    $region9: #{trans_loss_pallas.1} parent=1 // pred_fallthru
      _
    // Predicated region
    $region10: #{trans_loss_pallas.1} parent=1 // pred_check
      _
    $region11: #{trans_loss_pallas.1} parent=1 // pred_check_branch
      %22 = sbr.rel (0) target = $region13
    $region12: #{trans_loss_pallas.1} parent=1 // pred_region
      %23 = dma.done [#allocation4], 16
    $region13: #{trans_loss_pallas.1} parent=1 // pred_fallthru
      _
    %24 = sfence
    %s25 = sld [smem:[#allocation2]]
    %s26 = sld [smem:[#allocation2 + $0x1]]
    %v27 = vld [vmem:[%s1] sm:$0xff]
    %v28 = vld [vmem:[%s1 + $0x8] sm:$0xff]
    %v29 = vld [vmem:[%s1 + $0x10] sm:$0xff]
    %v30 = vld [vmem:[%s1 + $0x18] sm:$0xff]
    %v31 = vstv %s26
    %v32 = vmin.f32 %v27, %v31
    %v33 = vmin.f32 %v28, %v31
    %v34 = vmin.f32 %v29, %v31
    %v35 = vmin.f32 %v30, %v31
    %v36 = vstv %s25
    %v37 = vmul.f32 %v36, %v32
    %v38 = vmul.f32 %v36, %v33
    %v39 = vmul.f32 %v36, %v34
    %v40 = vmul.f32 %v36, %v35
    %41 = vst [vmem:[#allocation5] sm:$0xff] %v37
    %42 = vst [vmem:[#allocation5 + $0x8] sm:$0xff] %v38
    %43 = vst [vmem:[#allocation5 + $0x10] sm:$0xff] %v39
    %44 = vst [vmem:[#allocation5 + $0x18] sm:$0xff] %v40
    // Predicated region
    $region14: #{trans_loss_pallas.1} parent=1 // pred_check
      _
    $region15: #{trans_loss_pallas.1} parent=1 // pred_check_branch
      %46 = sbr.rel (0) target = $region17
    $region16: #{trans_loss_pallas.1} parent=1 // pred_region
      %s48 = ssub.s32 512, 512
      %49 = vsyncadd [#allocation3], %s48
      %s50 = sshll.u32 [#allocation5], 4
      %s51 = int_to_ptr.vmem [resolvable:$true] %s50
      %56 = dma.vmem_to_hbm [thread:$0]  %s51, 512, %s2, [#allocation3], 256, 256, 16
    $region17: #{trans_loss_pallas.1} parent=1 // pred_fallthru
      _
    // Predicated region
    $region18: #{trans_loss_pallas.1} parent=1 // pred_check
      _
    $region19: #{trans_loss_pallas.1} parent=1 // pred_check_branch
      %58 = sbr.rel (0) target = $region21
    $region20: #{trans_loss_pallas.1} parent=1 // pred_region
      %59 = dma.done [#allocation3], 512
    $region21: #{trans_loss_pallas.1} parent=1 // pred_fallthru
      _
    %60 = vsyncpa [#allocation3], 1
    %61 = vsyncpa [#allocation4], 1

</llo_original>
